<compile_context>
chip_gen: v6e
topology: v6e:2x2x1
jax: 0.10.0
libtpu: 0.0.40
codegen_flags: <defaults>
</compile_context>

<pallas_src>
import jax
import jax.numpy as jnp
from jax.experimental import pallas as pl
from jax.experimental.pallas import tpu as pltpu

D_HID = 16
LANE = 128


def expert_layer_kernel(w1_ref, b1_ref, w2_ref, b2_ref, x_ref, o_ref):
    # x_ref: (D, TB) batch-on-lanes.  w*_ref: (D, D) in PyTorch (out, in) order.
    x = x_ref[...]
    h = jnp.dot(w1_ref[...], x, preferred_element_type=jnp.float32) + b1_ref[...]
    h = jnp.maximum(h, 0.0)                                            # ReLU
    o = jnp.dot(w2_ref[...], h, preferred_element_type=jnp.float32) + b2_ref[...]
    o_ref[...] = o.astype(o_ref.dtype)


def expert_layer_forward(x, w1, b1, w2, b2, *, block_b=2048):
    """x: (B, D) float32 -> (B, D), matching torch Linear -> ReLU -> Linear."""
    B, D = x.shape
    assert D == D_HID
    # Pad batch up to a multiple of 128 lanes, then to a multiple of the tile.
    padded = ((B + LANE - 1) // LANE) * LANE
    tb = min(block_b, padded)
    padded = ((padded + tb - 1) // tb) * tb
    xt = jnp.zeros((D, padded), jnp.float32).at[:, :B].set(x.T.astype(jnp.float32))

    const2 = lambda i: (0, 0)
    out_t = pl.pallas_call(
        expert_layer_kernel,
        out_shape=jax.ShapeDtypeStruct((D, padded), jnp.float32),
        grid_spec=pltpu.PrefetchScalarGridSpec(
            num_scalar_prefetch=0,
            grid=(padded // tb,),
            in_specs=[
                pl.BlockSpec((D, D), const2),             # w1 (out,in), VMEM-resident
                pl.BlockSpec((D, 1), const2),             # b1 (out, 1)
                pl.BlockSpec((D, D), const2),             # w2
                pl.BlockSpec((D, 1), const2),             # b2
                pl.BlockSpec((D, tb), lambda i: (0, i)),  # x^T tile, lane-dense
            ],
            out_specs=pl.BlockSpec((D, tb), lambda i: (0, i)),
        ),
        compiler_params=pltpu.CompilerParams(
            dimension_semantics=("parallel",),
        ),
    )(w1, b1, w2, b2, xt)
    return out_t[:, :B].T


def init_params(key, d_hid=D_HID):
    # torch.nn.Linear default init: U(-1/sqrt(in), 1/sqrt(in)); weight is (out, in).
    bound = 1.0 / jnp.sqrt(jnp.float32(d_hid))
    k1, k2, k3, k4 = jax.random.split(key, 4)
    w1 = jax.random.uniform(k1, (d_hid, d_hid), jnp.float32, -bound, bound)
    b1 = jax.random.uniform(k2, (d_hid, 1), jnp.float32, -bound, bound)
    w2 = jax.random.uniform(k3, (d_hid, d_hid), jnp.float32, -bound, bound)
    b2 = jax.random.uniform(k4, (d_hid, 1), jnp.float32, -bound, bound)
    return w1, b1, w2, b2


def reference_forward(x, w1, b1, w2, b2):
    h = jnp.maximum(x @ w1.T + b1[:, 0], 0.0)
    return h @ w2.T + b2[:, 0]


if __name__ == "__main__":
    key = jax.random.PRNGKey(0)
    kx, kp = jax.random.split(key)

    batch = 8
    x = jax.random.normal(kx, (batch, D_HID), jnp.float32)
    w1, b1, w2, b2 = init_params(kp)

    out = expert_layer_forward(x, w1, b1, w2, b2)
    jax.block_until_ready(out)

    ref = reference_forward(x, w1, b1, w2, b2)
    assert out.shape == (batch, D_HID)
    assert jnp.allclose(out, ref, atol=1e-4, rtol=1e-4)

    print("KERNEL_OK")
</pallas_src>

<mosaic_0001>
module attributes {stable_mosaic.version = 11 : i64} {
  func.func @expert_layer_kernel(%arg0: i32, %arg1: memref<16x16xf32, #tpu.memory_space<vmem>>, %arg2: memref<16x1xf32, #tpu.memory_space<vmem>>, %arg3: memref<16x16xf32, #tpu.memory_space<vmem>>, %arg4: memref<16x1xf32, #tpu.memory_space<vmem>>, %arg5: memref<16x128xf32, #tpu.memory_space<vmem>>, %arg6: memref<16x128xf32, #tpu.memory_space<vmem>>) attributes {dimension_semantics = [#tpu.dimension_semantics<parallel>], iteration_bounds = array<i64: 1>, scalar_prefetch = 0 : i64, scratch_operands = 0 : i64, tpu.core_type = #tpu.core_type<tc>, window_params = [{pipeline_mode = #tpu.pipeline_mode<synchronous>, transform_indices = @transform_0, window_bounds = array<i64: 16, 16>}, {pipeline_mode = #tpu.pipeline_mode<synchronous>, transform_indices = @transform_1, window_bounds = array<i64: 16, 1>}, {pipeline_mode = #tpu.pipeline_mode<synchronous>, transform_indices = @transform_2, window_bounds = array<i64: 16, 16>}, {pipeline_mode = #tpu.pipeline_mode<synchronous>, transform_indices = @transform_3, window_bounds = array<i64: 16, 1>}, {transform_indices = @transform_4, window_bounds = array<i64: 16, 128>}, {transform_indices = @transform_5, window_bounds = array<i64: 16, 128>}]} {
    %c0 = arith.constant 0 : index
    %c0_0 = arith.constant 0 : index
    %0 = vector.load %arg5[%c0, %c0_0] : memref<16x128xf32, #tpu.memory_space<vmem>>, vector<16x128xf32>
    %c0_1 = arith.constant 0 : index
    %c0_2 = arith.constant 0 : index
    %1 = vector.load %arg1[%c0_1, %c0_2] : memref<16x16xf32, #tpu.memory_space<vmem>>, vector<16x16xf32>
    %cst = arith.constant dense<0.000000e+00> : vector<16x128xf32>
    %2 = tpu.matmul %1, %0, %cst {dimension_numbers = #tpu.dot_dimension_numbers<[1], [0], [0], [1], [0, 0, 1, 1], [], []>} : vector<16x16xf32>, vector<16x128xf32>, vector<16x128xf32> -> vector<16x128xf32>
    %c0_3 = arith.constant 0 : index
    %c0_4 = arith.constant 0 : index
    %3 = vector.load %arg2[%c0_3, %c0_4] : memref<16x1xf32, #tpu.memory_space<vmem>>, vector<16x1xf32>
    %4 = vector.broadcast %3 : vector<16x1xf32> to vector<16x128xf32>
    %5 = arith.addf %2, %4 : vector<16x128xf32>
    %cst_5 = arith.constant 0.000000e+00 : f32
    %6 = vector.broadcast %cst_5 : f32 to vector<16x128xf32>
    %7 = arith.maximumf %5, %6 : vector<16x128xf32>
    %c0_6 = arith.constant 0 : index
    %c0_7 = arith.constant 0 : index
    %8 = vector.load %arg3[%c0_6, %c0_7] : memref<16x16xf32, #tpu.memory_space<vmem>>, vector<16x16xf32>
    %cst_8 = arith.constant dense<0.000000e+00> : vector<16x128xf32>
    %9 = tpu.matmul %8, %7, %cst_8 {dimension_numbers = #tpu.dot_dimension_numbers<[1], [0], [0], [1], [0, 0, 1, 1], [], []>} : vector<16x16xf32>, vector<16x128xf32>, vector<16x128xf32> -> vector<16x128xf32>
    %c0_9 = arith.constant 0 : index
    %c0_10 = arith.constant 0 : index
    %10 = vector.load %arg4[%c0_9, %c0_10] : memref<16x1xf32, #tpu.memory_space<vmem>>, vector<16x1xf32>
    %11 = vector.broadcast %10 : vector<16x1xf32> to vector<16x128xf32>
    %12 = arith.addf %9, %11 : vector<16x128xf32>
    %c0_11 = arith.constant 0 : index
    %c0_12 = arith.constant 0 : index
    %13 = vector.load %arg6[%c0_11, %c0_12] : memref<16x128xf32, #tpu.memory_space<vmem>>, vector<16x128xf32>
    tpu.vector_store %arg6[%c0_11, %c0_12], %12 {strides = array<i32>} : memref<16x128xf32, #tpu.memory_space<vmem>>, vector<16x128xf32>,
    return
  }
  func.func @transform_0(%arg0: i32) -> (i32, i32) {
    %c0_i32 = arith.constant 0 : i32
    %c0_i32_0 = arith.constant 0 : i32
    %c0_i32_1 = arith.constant 0 : i32
    return %c0_i32, %c0_i32_0 : i32, i32
  }
  func.func @transform_1(%arg0: i32) -> (i32, i32) {
    %c0_i32 = arith.constant 0 : i32
    %c0_i32_0 = arith.constant 0 : i32
    %c0_i32_1 = arith.constant 0 : i32
    return %c0_i32, %c0_i32_0 : i32, i32
  }
  func.func @transform_2(%arg0: i32) -> (i32, i32) {
    %c0_i32 = arith.constant 0 : i32
    %c0_i32_0 = arith.constant 0 : i32
    %c0_i32_1 = arith.constant 0 : i32
    return %c0_i32, %c0_i32_0 : i32, i32
  }
  func.func @transform_3(%arg0: i32) -> (i32, i32) {
    %c0_i32 = arith.constant 0 : i32
    %c0_i32_0 = arith.constant 0 : i32
    %c0_i32_1 = arith.constant 0 : i32
    return %c0_i32, %c0_i32_0 : i32, i32
  }
  func.func @transform_4(%arg0: i32) -> (i32, i32) {
    %c0_i32 = arith.constant 0 : i32
    %c0_i32_0 = arith.constant 0 : i32
    return %c0_i32, %arg0 : i32, i32
  }
  func.func @transform_5(%arg0: i32) -> (i32, i32) {
    %c0_i32 = arith.constant 0 : i32
    %c0_i32_0 = arith.constant 0 : i32
    return %c0_i32, %arg0 : i32, i32
  }
}

</mosaic_0001>

<llo_original>
// kernel: tpu_custom_call.1
$region0: #{tpu_custom_call.1}
  #allocation0 [shape = 'u32[]', space=smem, size = 0x4, offset = 0x4, fixed_abs, tag = 'smem constant byte address 0x4 - core index']
  #allocation1 [shape = 'u32[144,128]{1,0:T(1,128)}', space=vmem, size = 0x12000, scoped, tag = 'internal scratch']
  %s0 = inlined_call_operand.vmem [shape: f32[16,16], index: 0, kind: input, shape index: {}]
  %s1 = inlined_call_operand.vmem [shape: f32[16,1], index: 1, kind: input, shape index: {}]
  %s2 = inlined_call_operand.vmem [shape: f32[16,16], index: 2, kind: input, shape index: {}]
  %s3 = inlined_call_operand.vmem [shape: f32[16,1], index: 3, kind: input, shape index: {}]
  %s4 = inlined_call_operand.hbm [shape: f32[16,128], index: 4, kind: input, shape index: {}]
  %s5 = inlined_call_operand.hbm [shape: f32[16,128], index: 5, kind: output, shape index: {}]
  %s6 = sld [smem:[#allocation0]]
  $region34: #{tpu_custom_call.1} parent=0
    _
  %s8 = ssub.s32 1, %s6
  %s9 = scalar_select 0, %s8, %s6
  $region1: #{tpu_custom_call.1} parent=0
    #allocation2 [shape = 'u8[8192]{0}', space=vmem, size = 0x2000, scoped, tag = 'input window, operand 4, single buffered']
    #allocation3 [shape = 's32[1]{0}', space=sflag, size = 0x4, scoped, tag = 'scoped memory for tpu_custom_call.1']
    #allocation4 [shape = 's32[1]{0}', space=sflag, size = 0x4, scoped, tag = 'scoped memory for tpu_custom_call.1']
    #allocation5 [shape = 'u8[8192]{0}', space=vmem, size = 0x2000, scoped, tag = 'output window, operand 0, single buffered']
    %10 = vsyncpa [#allocation3], 0
    %11 = vsyncpa [#allocation4], 0
    // Predicated region
    $region2: #{tpu_custom_call.1} parent=1 // pred_check
      _
    $region3: #{tpu_custom_call.1} parent=1 // pred_check_branch
      %13 = sbr.rel (0) target = $region5
    $region4: #{tpu_custom_call.1} parent=1 // pred_region
      _
    $region5: #{tpu_custom_call.1} parent=1 // pred_fallthru
      _
    // Predicated region
    $region6: #{tpu_custom_call.1} parent=1 // pred_check
      _
    $region7: #{tpu_custom_call.1} parent=1 // pred_check_branch
      %15 = sbr.rel (0) target = $region9
    $region8: #{tpu_custom_call.1} parent=1 // pred_region
      _
    $region9: #{tpu_custom_call.1} parent=1 // pred_fallthru
      _
    // Predicated region
    $region10: #{tpu_custom_call.1} parent=1 // pred_check
      _
    $region11: #{tpu_custom_call.1} parent=1 // pred_check_branch
      %17 = sbr.rel (0) target = $region13
    $region12: #{tpu_custom_call.1} parent=1 // pred_region
      _
    $region13: #{tpu_custom_call.1} parent=1 // pred_fallthru
      _
    // Predicated region
    $region14: #{tpu_custom_call.1} parent=1 // pred_check
      _
    $region15: #{tpu_custom_call.1} parent=1 // pred_check_branch
      %19 = sbr.rel (0) target = $region17
    $region16: #{tpu_custom_call.1} parent=1 // pred_region
      _
    $region17: #{tpu_custom_call.1} parent=1 // pred_fallthru
      _
    // Predicated region
    $region18: #{tpu_custom_call.1} parent=1 // pred_check
      _
    $region19: #{tpu_custom_call.1} parent=1 // pred_check_branch
      %21 = sbr.rel (0) target = $region21
    $region20: #{tpu_custom_call.1} parent=1 // pred_region
      %s23 = ssub.s32 256, 256
      %24 = vsyncadd [#allocation3], %s23
      %s25 = sshll.u32 [#allocation2], 4
      %s26 = int_to_ptr.vmem [resolvable:$true] %s25
      %31 = dma.hbm_to_vmem [thread:$0]  %s4, 256, %s26, [#allocation3], 128, 128, 8
    $region21: #{tpu_custom_call.1} parent=1 // pred_fallthru
      _
    // Predicated region
    $region22: #{tpu_custom_call.1} parent=1 // pred_check
      _
    $region23: #{tpu_custom_call.1} parent=1 // pred_check_branch
      %33 = sbr.rel (0) target = $region25
    $region24: #{tpu_custom_call.1} parent=1 // pred_region
      %34 = dma.done [#allocation3], 256
    $region25: #{tpu_custom_call.1} parent=1 // pred_fallthru
      _
    %v35 = vld [vmem:[#allocation2] sm:$0xff]
    %v36 = vld [vmem:[#allocation2 + $0x8] sm:$0xff]
    %v37 = vld [vmem:[%s0] sm:$0xff]
    %v38 = vld [vmem:[%s0 + $0x8] sm:$0xff]
    %v39 = vld [vmem:[%s1] sm:$0xff]
    %v40 = vld [vmem:[%s1 + $0x8] sm:$0xff]
    %42 = vset.pattern.permute.xlu0 0
    %43 = vperm.xlu0 %42, %v39
    %v44 = vpop.permute.xlu0 %43
    %47 = vset.pattern.permute.xlu0 0
    %48 = vperm.xlu0 %47, %v40
    %v49 = vpop.permute.xlu0 %48
    %vm51 = vcmask 130048
    %v53 = vsel %vm51, %v37, 0
    %v56 = vsel %vm51, %v38, 0
    %58 = vmatprep.subr.mxu0 0.0
    %59 = vmatpush1.msra.mxu0 0.0
    %60 = vmatprep.subr.mxu0 0.0
    %61 = vmatpush1.msra.mxu0 0.0
    %62 = vmatprep.subr.mxu0 0.0
    %63 = vmatpush1.msra.mxu0 0.0
    %64 = vmatprep.subr.mxu0 0.0
    %65 = vmatpush1.msra.mxu0 0.0
    %66 = vmatprep.subr.mxu0 0.0
    %67 = vmatpush1.msra.mxu0 0.0
    %68 = vmatprep.subr.mxu0 0.0
    %69 = vmatpush1.msra.mxu0 0.0
    %70 = vmatprep.subr.mxu0 0.0
    %71 = vmatpush1.msra.mxu0 0.0
    %72 = vmatprep.subr.mxu0 0.0
    %73 = vmatpush1.msra.mxu0 0.0
    %74 = vmatprep.subr.mxu0 0.0
    %75 = vmatpush1.msra.mxu0 0.0
    %76 = vmatprep.subr.mxu0 0.0
    %77 = vmatpush1.msra.mxu0 0.0
    %78 = vmatprep.subr.mxu0 0.0
    %79 = vmatpush1.msra.mxu0 0.0
    %80 = vmatprep.subr.mxu0 0.0
    %81 = vmatpush1.msra.mxu0 0.0
    %82 = vmatprep.subr.mxu0 0.0
    %83 = vmatpush1.msra.mxu0 0.0
    %84 = vmatprep.subr.mxu0 0.0
    %85 = vmatpush1.msra.mxu0 0.0
    %86 = vmatprep.subr.mxu0 0.0
    %87 = vmatpush1.msra.mxu0 %v36
    %88 = vmatprep.subr.mxu0 0.0
    %89 = vmatpush1.msra.mxu0 %v35
    %90 = vmatprep.subr.mxu0 0.0
    %91 = vmatpush2.msra.mxu0 0.0
    %92 = vmatprep.subr.mxu0 0.0
    %93 = vmatpush2.msra.mxu0 0.0
    %94 = vmatprep.subr.mxu0 0.0
    %95 = vmatpush2.msra.mxu0 0.0
    %96 = vmatprep.subr.mxu0 0.0
    %97 = vmatpush2.msra.mxu0 0.0
    %98 = vmatprep.subr.mxu0 0.0
    %99 = vmatpush2.msra.mxu0 0.0
    %100 = vmatprep.subr.mxu0 0.0
    %101 = vmatpush2.msra.mxu0 0.0
    %102 = vmatprep.subr.mxu0 0.0
    %103 = vmatpush2.msra.mxu0 0.0
    %104 = vmatprep.subr.mxu0 0.0
    %105 = vmatpush2.msra.mxu0 0.0
    %106 = vmatprep.subr.mxu0 0.0
    %107 = vmatpush2.msra.mxu0 0.0
    %108 = vmatprep.subr.mxu0 0.0
    %109 = vmatpush2.msra.mxu0 0.0
    %110 = vmatprep.subr.mxu0 0.0
    %111 = vmatpush2.msra.mxu0 0.0
    %112 = vmatprep.subr.mxu0 0.0
    %113 = vmatpush2.msra.mxu0 0.0
    %114 = vmatprep.subr.mxu0 0.0
    %115 = vmatpush2.msra.mxu0 0.0
    %116 = vmatprep.subr.mxu0 0.0
    %117 = vmatpush2.msra.mxu0 0.0
    %118 = vmatprep.subr.mxu0 0.0
    %119 = vmatpush2.msra.mxu0 0.0
    %120 = vmatprep.subr.mxu0 0.0
    %121 = vmatpush2.msra.mxu0 0.0
    %122 = vmatprep.mubr.f32.mxu0 0.0
    %123 = vmatmul.mubr.f32.gmra.mxu0 %v53
    %v124 = vpop.f32.mrf.mxu0
    %v125 = vadd.f32 %v44, %v124
    %v126 = vpop.f32.mrf.mxu0
    %127 = vmatprep.mubr.f32.mxu0 0.0
    %128 = vmatmul.mubr.f32.gmra.mxu0 %v56
    %v129 = vpop.f32.mrf.mxu0
    %v130 = vadd.f32 %v49, %v129
    %v131 = vpop.f32.mrf.mxu0
    %132 = vdwg.mxu0
    %v133 = vmax.f32 %v125, 0.0
    %v134 = vmax.f32 %v130, 0.0
    %v135 = vld [vmem:[%s2] sm:$0xff]
    %v136 = vld [vmem:[%s2 + $0x8] sm:$0xff]
    %v137 = vld [vmem:[%s3] sm:$0xff]
    %v138 = vld [vmem:[%s3 + $0x8] sm:$0xff]
    %140 = vset.pattern.permute.xlu0 0
    %141 = vperm.xlu0 %140, %v137
    %v142 = vpop.permute.xlu0 %141
    %145 = vset.pattern.permute.xlu0 0
    %146 = vperm.xlu0 %145, %v138
    %v147 = vpop.permute.xlu0 %146
    %v150 = vsel %vm51, %v135, 0
    %v153 = vsel %vm51, %v136, 0
    %155 = vmatprep.subr.mxu0 0.0
    %156 = vmatpush1.msra.mxu0 0.0
    %157 = vmatprep.subr.mxu0 0.0
    %158 = vmatpush1.msra.mxu0 0.0
    %159 = vmatprep.subr.mxu0 0.0
    %160 = vmatpush1.msra.mxu0 0.0
    %161 = vmatprep.subr.mxu0 0.0
    %162 = vmatpush1.msra.mxu0 0.0
    %163 = vmatprep.subr.mxu0 0.0
    %164 = vmatpush1.msra.mxu0 0.0
    %165 = vmatprep.subr.mxu0 0.0
    %166 = vmatpush1.msra.mxu0 0.0
    %167 = vmatprep.subr.mxu0 0.0
    %168 = vmatpush1.msra.mxu0 0.0
    %169 = vmatprep.subr.mxu0 0.0
    %170 = vmatpush1.msra.mxu0 0.0
    %171 = vmatprep.subr.mxu0 0.0
    %172 = vmatpush1.msra.mxu0 0.0
    %173 = vmatprep.subr.mxu0 0.0
    %174 = vmatpush1.msra.mxu0 0.0
    %175 = vmatprep.subr.mxu0 0.0
    %176 = vmatpush1.msra.mxu0 0.0
    %177 = vmatprep.subr.mxu0 0.0
    %178 = vmatpush1.msra.mxu0 0.0
    %179 = vmatprep.subr.mxu0 0.0
    %180 = vmatpush1.msra.mxu0 0.0
    %181 = vmatprep.subr.mxu0 0.0
    %182 = vmatpush1.msra.mxu0 0.0
    %183 = vmatprep.subr.mxu0 0.0
    %184 = vmatpush1.msra.mxu0 %v134
    %185 = vmatprep.subr.mxu0 0.0
    %186 = vmatpush1.msra.mxu0 %v133
    %187 = vmatprep.subr.mxu0 0.0
    %188 = vmatpush2.msra.mxu0 0.0
    %189 = vmatprep.subr.mxu0 0.0
    %190 = vmatpush2.msra.mxu0 0.0
    %191 = vmatprep.subr.mxu0 0.0
    %192 = vmatpush2.msra.mxu0 0.0
    %193 = vmatprep.subr.mxu0 0.0
    %194 = vmatpush2.msra.mxu0 0.0
    %195 = vmatprep.subr.mxu0 0.0
    %196 = vmatpush2.msra.mxu0 0.0
    %197 = vmatprep.subr.mxu0 0.0
    %198 = vmatpush2.msra.mxu0 0.0
    %199 = vmatprep.subr.mxu0 0.0
    %200 = vmatpush2.msra.mxu0 0.0
    %201 = vmatprep.subr.mxu0 0.0
    %202 = vmatpush2.msra.mxu0 0.0
    %203 = vmatprep.subr.mxu0 0.0
    %204 = vmatpush2.msra.mxu0 0.0
    %205 = vmatprep.subr.mxu0 0.0
    %206 = vmatpush2.msra.mxu0 0.0
    %207 = vmatprep.subr.mxu0 0.0
    %208 = vmatpush2.msra.mxu0 0.0
    %209 = vmatprep.subr.mxu0 0.0
    %210 = vmatpush2.msra.mxu0 0.0
    %211 = vmatprep.subr.mxu0 0.0
    %212 = vmatpush2.msra.mxu0 0.0
    %213 = vmatprep.subr.mxu0 0.0
    %214 = vmatpush2.msra.mxu0 0.0
    %215 = vmatprep.subr.mxu0 0.0
    %216 = vmatpush2.msra.mxu0 0.0
    %217 = vmatprep.subr.mxu0 0.0
    %218 = vmatpush2.msra.mxu0 0.0
    %219 = vmatprep.mubr.f32.mxu0 0.0
    %220 = vmatmul.mubr.f32.gmra.mxu0 %v150
    %v221 = vpop.f32.mrf.mxu0
    %v222 = vadd.f32 %v142, %v221
    %v223 = vpop.f32.mrf.mxu0
    %224 = vmatprep.mubr.f32.mxu0 0.0
    %225 = vmatmul.mubr.f32.gmra.mxu0 %v153
    %v226 = vpop.f32.mrf.mxu0
    %v227 = vadd.f32 %v147, %v226
    %v228 = vpop.f32.mrf.mxu0
    %229 = vdwg.mxu0
    %230 = vst [vmem:[#allocation5] sm:$0xff] %v222
    %231 = vst [vmem:[#allocation5 + $0x8] sm:$0xff] %v227
    // Predicated region
    $region26: #{tpu_custom_call.1} parent=1 // pred_check
      _
    $region27: #{tpu_custom_call.1} parent=1 // pred_check_branch
      %233 = sbr.rel (0) target = $region29
    $region28: #{tpu_custom_call.1} parent=1 // pred_region
      %s235 = ssub.s32 256, 256
      %236 = vsyncadd [#allocation4], %s235
      %s237 = sshll.u32 [#allocation5], 4
      %s238 = int_to_ptr.vmem [resolvable:$true] %s237
      %243 = dma.vmem_to_hbm [thread:$0]  %s238, 256, %s5, [#allocation4], 128, 128, 8
    $region29: #{tpu_custom_call.1} parent=1 // pred_fallthru
      _
    // Predicated region
    $region30: #{tpu_custom_call.1} parent=1 // pred_check
      _
    $region31: #{tpu_custom_call.1} parent=1 // pred_check_branch
      %245 = sbr.rel (0) target = $region33
    $region32: #{tpu_custom_call.1} parent=1 // pred_region
      %246 = dma.done [#allocation4], 256
    $region33: #{tpu_custom_call.1} parent=1 // pred_fallthru
      _
    %247 = vsyncpa [#allocation3], 1
    %248 = vsyncpa [#allocation4], 1

</llo_original>
